<compile_context>
chip_gen: v7x
topology: tpu7x:2x2x1
jax: 0.10.0
libtpu: 0.0.40
codegen_flags: <defaults>
</compile_context>

<pallas_src>
import jax
import jax.numpy as jnp
from jax.experimental import pallas as pl
from jax.experimental.pallas import tpu as pltpu


def _round_up(n, m):
    return ((n + m - 1) // m) * m


def _window_mlp_kernel(x_ref, w1_ref, b1_ref, a1_ref, w2_ref, b2_ref, a2_ref,
                       out_ref, h1_acc):
    """One (block_rows, block_k) tile of the per-window MLP.

    grid = (row blocks [parallel], K blocks [arbitrary reduction]).
    h1_acc: f32 VMEM scratch (block_rows, H1p), accumulated over the K axis.
    """
    k = pl.program_id(1)

    @pl.when(k == 0)
    def _init():
        h1_acc[...] = jnp.zeros_like(h1_acc)

    # First linear layer, K-blocked: X arrives f32 from HBM and is cast to
    # bf16 per tile (cheap VPU work hidden under the W1 slab DMA); f32 accum.
    h1_acc[...] += jnp.dot(x_ref[...].astype(jnp.bfloat16), w1_ref[...],
                           preferred_element_type=jnp.float32)

    @pl.when(k == pl.num_programs(1) - 1)
    def _finalize():
        # Bias + PReLU (single shared alpha) in f32, written back into the
        # accumulator in place (no fresh (block_rows, H1p) f32 temp).
        h1 = h1_acc[...] + b1_ref[...]
        alpha1 = a1_ref[0]
        h1_acc[...] = jnp.where(h1 > 0, h1, alpha1 * h1)

        # Second linear layer: bf16 MXU operands only at the dot, f32 accum.
        h2 = jnp.dot(h1_acc[...].astype(jnp.bfloat16), w2_ref[...],
                     preferred_element_type=jnp.float32) + b2_ref[...]
        alpha2 = a2_ref[0]
        out_ref[...] = jnp.where(h2 > 0, h2, alpha2 * h2)


def ssr_forward_pallas(x, params, *, win, step, block_rows=256, block_k=4096):
    """x: (B, T, C) float32 wav2vec2 features.  Returns logits (B, classes)."""
    assert win == step, "module uses win == step == 149; kernel assumes equality"
    assert block_k % 128 == 0, "K tile must be lane-aligned"
    assert block_rows % 8 == 0, "row tile must be sublane-aligned"

    B, T, C = x.shape
    w1, b1, a1, w2, b2, a2, wf, bf = params
    K = win * C
    H1 = w1.shape[1]
    H2 = w2.shape[1]

    num_win = (T - win) // step + 1
    assert num_win >= 1, "need at least one full window"

    # Flatten every full window into an MXU row: (B*NW, win*C).
    # win == step -> contiguous windows: slice + free, order-preserving reshape.
    xw = x[:, : num_win * win, :].reshape(B * num_win, K)
    N = B * num_win

    # Padded sizes: lane-dense H1/H2; tiles clamped to the (padded) problem.
    H1p = _round_up(H1, 128)
    H2p = _round_up(H2, 128)
    br = min(block_rows, _round_up(N, 8))      # effective row tile
    bk = min(block_k, _round_up(K, 128))       # effective K tile
    Np = _round_up(N, br)
    Kp = _round_up(K, bk)

    # Pad only what block alignment requires.  X stays f32 (cast in-kernel),
    # so no extra XLA pass materializes a bf16 copy of the features in HBM.
    # Zero padding is exact: padded K rows/cols contribute 0 to the dot and
    # padded H1/H2 lanes stay 0 through bias(0) + PReLU(0); sliced off below.
    xw_p = jnp.pad(xw, ((0, Np - N), (0, Kp - K)))
    w1_p = jnp.pad(w1, ((0, Kp - K), (0, H1p - H1))).astype(jnp.bfloat16)
    b1_p = jnp.pad(b1, ((0, 0), (0, H1p - H1))).astype(jnp.float32)
    w2_p = jnp.pad(w2, ((0, H1p - H1), (0, H2p - H2))).astype(jnp.bfloat16)
    b2_p = jnp.pad(b2, ((0, 0), (0, H2p - H2))).astype(jnp.float32)

    num_row_blocks = Np // br
    num_k_blocks = Kp // bk
    grid = (num_row_blocks, num_k_blocks)

    # Deepen the pipeline on the streamed operands when the K loop is long
    # enough to benefit (costs one extra slab of VMEM per buffered input).
    if num_k_blocks > 2:
        x_spec = pl.BlockSpec((br, bk), lambda m, k: (m, k),
                              pipeline_mode=pl.Buffered(3))
        w1_spec = pl.BlockSpec((bk, H1p), lambda m, k: (k, 0),
                               pipeline_mode=pl.Buffered(3))
        stream_bufs = 3
    else:
        x_spec = pl.BlockSpec((br, bk), lambda m, k: (m, k))
        w1_spec = pl.BlockSpec((bk, H1p), lambda m, k: (k, 0))
        stream_bufs = 2

    # VMEM budget from the actual tile footprint; ≥32 MiB (scoped default on
    # v6e/v7x) and capped at 48 MiB so the same config also fits v7x (64 MiB).
    vmem_needed = (stream_bufs * br * bk * 4          # f32 X tiles
                   + stream_bufs * bk * H1p * 2        # bf16 W1 slabs
                   + 2 * H1p * H2p * 2                 # bf16 W2 (double-buffered)
                   + 2 * (H1p + H2p) * 4               # biases
                   + br * H1p * 4                      # h1 accumulator scratch
                   + 2 * br * H2p * 4)                 # f32 output tiles
    vmem_limit = int(min(max(vmem_needed * 5 // 4 + (2 << 20), 32 << 20),
                         48 << 20))

    grid_spec = pltpu.PrefetchScalarGridSpec(
        num_scalar_prefetch=0,
        grid=grid,
        in_specs=[
            x_spec,                                                # X rows
            w1_spec,                                               # W1 slab
            pl.BlockSpec((1, H1p), lambda m, k: (0, 0)),           # b1
            pl.BlockSpec(memory_space=pltpu.MemorySpace.SMEM),     # alpha1
            pl.BlockSpec((H1p, H2p), lambda m, k: (0, 0)),         # W2
            pl.BlockSpec((1, H2p), lambda m, k: (0, 0)),           # b2
            pl.BlockSpec(memory_space=pltpu.MemorySpace.SMEM),     # alpha2
        ],
        out_specs=pl.BlockSpec((br, H2p), lambda m, k: (m, 0)),
        scratch_shapes=[pltpu.VMEM((br, H1p), jnp.float32)],
    )

    h2_all = pl.pallas_call(
        _window_mlp_kernel,
        out_shape=jax.ShapeDtypeStruct((Np, H2p), jnp.float32),
        grid_spec=grid_spec,
        compiler_params=pltpu.CompilerParams(
            dimension_semantics=("parallel", "arbitrary"),
            vmem_limit_bytes=vmem_limit),
    )(xw_p, w1_p, b1_p, a1, w2_p, b2_p, a2)

    # Hoisted (tiny, lane-sparse) epilogue: sum over windows + classifier.
    logits = h2_all[:N, :H2].reshape(B, num_win, H2).sum(axis=1)
    return logits @ wf + bf


def ssr_forward_ref(x, params, *, win, step):
    """Pure-JAX f32 reference reproducing the PyTorch while-loop semantics."""
    B, T, C = x.shape
    w1, b1, a1, w2, b2, a2, wf, bf = params

    def prelu(v, a):
        return jnp.where(v > 0, v, a * v)

    logits = jnp.zeros((B, w2.shape[1]), jnp.float32)
    start = 0
    while start + win <= T:
        seg = x[:, start:start + win, :].reshape(B, -1)
        h1 = prelu(seg @ w1 + b1, a1[0])
        h2 = prelu(h1 @ w2 + b2, a2[0])
        logits = logits + h2
        start += step
    # tail window: computed-but-discarded in the original code -> skip
    return logits @ wf + bf


def ssr_forward_ref_bf16(x, params, *, win, step):
    """Reference matching the kernel numerics (bf16 MXU inputs, f32 accum)."""
    B, T, C = x.shape
    w1, b1, a1, w2, b2, a2, wf, bf = params
    w1b = w1.astype(jnp.bfloat16)
    w2b = w2.astype(jnp.bfloat16)

    def prelu(v, a):
        return jnp.where(v > 0, v, a * v)

    num_win = (T - win) // step + 1
    logits = jnp.zeros((B, w2.shape[1]), jnp.float32)
    for i in range(num_win):
        seg = x[:, i * win:(i + 1) * win, :].reshape(B, -1).astype(jnp.bfloat16)
        h1 = jnp.dot(seg, w1b, preferred_element_type=jnp.float32) + b1
        h1 = prelu(h1, a1[0])
        h2 = jnp.dot(h1.astype(jnp.bfloat16), w2b,
                     preferred_element_type=jnp.float32) + b2
        h2 = prelu(h2, a2[0])
        logits = logits + h2
    return logits @ wf + bf


def _make_params(key, K, H1, H2, classes):
    k = jax.random.split(key, 7)
    # PyTorch Linear stores W as (out, in) and computes x @ W.T — we store
    # the already-transposed form.
    w1 = jax.random.normal(k[0], (K, H1), jnp.float32) * 0.05
    b1 = jax.random.normal(k[1], (1, H1), jnp.float32) * 0.01
    a1 = jnp.full((1,), 0.25, jnp.float32)          # nn.PReLU() default
    w2 = jax.random.normal(k[2], (H1, H2), jnp.float32) * 0.05
    b2 = jax.random.normal(k[3], (1, H2), jnp.float32) * 0.01
    a2 = jnp.full((1,), 0.25, jnp.float32)
    wf = jax.random.normal(k[4], (H2, classes), jnp.float32) * 0.05
    bf = jax.random.normal(k[5], (1, classes), jnp.float32) * 0.01
    return (w1, b1, a1, w2, b2, a2, wf, bf)


def _check(out, x, params, win, step):
    # Tight check against a reference with matching bf16-input/f32-accum math.
    ref_bf = ssr_forward_ref_bf16(x, params, win=win, step=step)
    assert jnp.allclose(out, ref_bf, atol=2e-3, rtol=1e-2), (out, ref_bf)
    # Loose check against the pure-f32 PyTorch-equivalent reference.
    ref_32 = ssr_forward_ref(x, params, win=win, step=step)
    assert jnp.allclose(out, ref_32, atol=2e-2, rtol=1e-1), (out, ref_32)


if __name__ == "__main__":
    key = jax.random.PRNGKey(0)

    # --- Case 1: small shapes, single row/K block (default large tiles clamp
    #             down to the problem size).  T=133 -> 16 full windows + a
    #             5-frame tail (discarded, as in the module).
    B, T, C = 2, 133, 32
    win = step = 8
    H1, H2, classes = 32, 8, 8
    k1, k2 = jax.random.split(key)
    x = jax.random.normal(k1, (B, T, C), jnp.float32)
    params = _make_params(k2, win * C, H1, H2, classes)

    out = ssr_forward_pallas(x, params, win=win, step=step)
    out = jax.block_until_ready(out)
    assert out.shape == (B, classes)
    _check(out, x, params, win, step)

    # --- Case 2: forces multiple row blocks and a multi-step K reduction
    #             (exercises the accumulator init/finalize, padded rows and
    #             the Buffered(3) streaming path) with small tile overrides.
    B2, T2, C2 = 2, 245, 64
    win2 = step2 = 12
    H1b, H2b, classes2 = 48, 16, 5
    k3, k4 = jax.random.split(k2)
    x2 = jax.random.normal(k3, (B2, T2, C2), jnp.float32)
    params2 = _make_params(k4, win2 * C2, H1b, H2b, classes2)

    out2 = ssr_forward_pallas(x2, params2, win=win2, step=step2,
                              block_rows=16, block_k=128)
    out2 = jax.block_until_ready(out2)
    assert out2.shape == (B2, classes2)
    _check(out2, x2, params2, win2, step2)

    print("KERNEL_OK")
</pallas_src>

<mosaic_0001>
module attributes {stable_mosaic.version = 11 : i64} {
  func.func @_window_mlp_kernel(%arg0: i32, %arg1: i32, %arg2: memref<32x256xf32, #tpu.memory_space<vmem>>, %arg3: memref<256x128xbf16, #tpu.memory_space<vmem>>, %arg4: memref<1x128xf32, #tpu.memory_space<vmem>>, %arg5: memref<1xf32, #tpu.memory_space<smem>>, %arg6: memref<128x128xbf16, #tpu.memory_space<vmem>>, %arg7: memref<1x128xf32, #tpu.memory_space<vmem>>, %arg8: memref<1xf32, #tpu.memory_space<smem>>, %arg9: memref<32x128xf32, #tpu.memory_space<vmem>>, %arg10: memref<32x128xf32, #tpu.memory_space<vmem>>) attributes {dimension_semantics = [#tpu.dimension_semantics<parallel>, #tpu.dimension_semantics<arbitrary>], iteration_bounds = array<i64: 1, 1>, scalar_prefetch = 0 : i64, scratch_operands = 1 : i64, tpu.core_type = #tpu.core_type<tc>, window_params = [{transform_indices = @transform_0, window_bounds = array<i64: 32, 256>}, {transform_indices = @transform_1, window_bounds = array<i64: 256, 128>}, {pipeline_mode = #tpu.pipeline_mode<synchronous>, transform_indices = @transform_2, window_bounds = array<i64: 1, 128>}, {transform_indices = @transform_3, window_bounds = array<i64: 1>}, {pipeline_mode = #tpu.pipeline_mode<synchronous>, transform_indices = @transform_4, window_bounds = array<i64: 128, 128>}, {pipeline_mode = #tpu.pipeline_mode<synchronous>, transform_indices = @transform_5, window_bounds = array<i64: 1, 128>}, {transform_indices = @transform_6, window_bounds = array<i64: 1>}, {transform_indices = @transform_7, window_bounds = array<i64: 32, 128>}]} {
    %c0_i32 = arith.constant 0 : i32
    %0 = arith.cmpi eq, %arg1, %c0_i32 : i32
    %1 = arith.extui %0 : i1 to i32
    %c0_i32_0 = arith.constant 0 : i32
    %2 = arith.cmpi ne, %1, %c0_i32_0 : i32
    scf.if %2 {
      %cst_10 = arith.constant 0.000000e+00 : f32
      %13 = vector.broadcast %cst_10 : f32 to vector<32x128xf32>
      %c0_11 = arith.constant 0 : index
      %c0_12 = arith.constant 0 : index
      %14 = vector.load %arg10[%c0_11, %c0_12] : memref<32x128xf32, #tpu.memory_space<vmem>>, vector<32x128xf32>
      tpu.vector_store %arg10[%c0_11, %c0_12], %13 {strides = array<i32>} : memref<32x128xf32, #tpu.memory_space<vmem>>, vector<32x128xf32>,
    } else {
    }
    %c0 = arith.constant 0 : index
    %c0_1 = arith.constant 0 : index
    %3 = vector.load %arg10[%c0, %c0_1] : memref<32x128xf32, #tpu.memory_space<vmem>>, vector<32x128xf32>
    %c0_2 = arith.constant 0 : index
    %c0_3 = arith.constant 0 : index
    %4 = vector.load %arg2[%c0_2, %c0_3] : memref<32x256xf32, #tpu.memory_space<vmem>>, vector<32x256xf32>
    %5 = arith.truncf %4 : vector<32x256xf32> to vector<32x256xbf16>
    %c0_4 = arith.constant 0 : index
    %c0_5 = arith.constant 0 : index
    %6 = vector.load %arg3[%c0_4, %c0_5] : memref<256x128xbf16, #tpu.memory_space<vmem>>, vector<256x128xbf16>
    %cst = arith.constant dense<0.000000e+00> : vector<32x128xf32>
    %7 = tpu.matmul %5, %6, %cst {dimension_numbers = #tpu.dot_dimension_numbers<[1], [0], [0], [1], [0, 0, 1, 1], [], []>} : vector<32x256xbf16>, vector<256x128xbf16>, vector<32x128xf32> -> vector<32x128xf32>
    %8 = arith.addf %3, %7 : vector<32x128xf32>
    %c0_6 = arith.constant 0 : index
    %c0_7 = arith.constant 0 : index
    %9 = vector.load %arg10[%c0_6, %c0_7] : memref<32x128xf32, #tpu.memory_space<vmem>>, vector<32x128xf32>
    tpu.vector_store %arg10[%c0_6, %c0_7], %8 {strides = array<i32>} : memref<32x128xf32, #tpu.memory_space<vmem>>, vector<32x128xf32>,
    %c0_i32_8 = arith.constant 0 : i32
    %10 = arith.cmpi eq, %arg1, %c0_i32_8 : i32
    %11 = arith.extui %10 : i1 to i32
    %c0_i32_9 = arith.constant 0 : i32
    %12 = arith.cmpi ne, %11, %c0_i32_9 : i32
    scf.if %12 {
      %c0_10 = arith.constant 0 : index
      %c0_11 = arith.constant 0 : index
      %13 = vector.load %arg10[%c0_10, %c0_11] : memref<32x128xf32, #tpu.memory_space<vmem>>, vector<32x128xf32>
      %c0_12 = arith.constant 0 : index
      %c0_13 = arith.constant 0 : index
      %14 = vector.load %arg4[%c0_12, %c0_13] : memref<1x128xf32, #tpu.memory_space<vmem>>, vector<1x128xf32>
      %15 = vector.broadcast %14 : vector<1x128xf32> to vector<32x128xf32>
      %16 = arith.addf %13, %15 : vector<32x128xf32>
      %c0_14 = arith.constant 0 : index
      %17 = memref.load %arg5[%c0_14] : memref<1xf32, #tpu.memory_space<smem>>
      %cst_15 = arith.constant 0.000000e+00 : f32
      %18 = vector.broadcast %cst_15 : f32 to vector<32x128xf32>
      %19 = arith.cmpf ogt, %16, %18 : vector<32x128xf32>
      %20 = vector.broadcast %17 : f32 to vector<32x128xf32>
      %21 = arith.mulf %20, %16 : vector<32x128xf32>
      %22 = arith.select %19, %16, %21 : vector<32x128xi1>, vector<32x128xf32>
      %c0_16 = arith.constant 0 : index
      %c0_17 = arith.constant 0 : index
      %23 = vector.load %arg10[%c0_16, %c0_17] : memref<32x128xf32, #tpu.memory_space<vmem>>, vector<32x128xf32>
      tpu.vector_store %arg10[%c0_16, %c0_17], %22 {strides = array<i32>} : memref<32x128xf32, #tpu.memory_space<vmem>>, vector<32x128xf32>,
      %c0_18 = arith.constant 0 : index
      %c0_19 = arith.constant 0 : index
      %24 = vector.load %arg10[%c0_18, %c0_19] : memref<32x128xf32, #tpu.memory_space<vmem>>, vector<32x128xf32>
      %25 = arith.truncf %24 : vector<32x128xf32> to vector<32x128xbf16>
      %c0_20 = arith.constant 0 : index
      %c0_21 = arith.constant 0 : index
      %26 = vector.load %arg6[%c0_20, %c0_21] : memref<128x128xbf16, #tpu.memory_space<vmem>>, vector<128x128xbf16>
      %cst_22 = arith.constant dense<0.000000e+00> : vector<32x128xf32>
      %27 = tpu.matmul %25, %26, %cst_22 {dimension_numbers = #tpu.dot_dimension_numbers<[1], [0], [0], [1], [0, 0, 1, 1], [], []>} : vector<32x128xbf16>, vector<128x128xbf16>, vector<32x128xf32> -> vector<32x128xf32>
      %c0_23 = arith.constant 0 : index
      %c0_24 = arith.constant 0 : index
      %28 = vector.load %arg7[%c0_23, %c0_24] : memref<1x128xf32, #tpu.memory_space<vmem>>, vector<1x128xf32>
      %29 = vector.broadcast %28 : vector<1x128xf32> to vector<32x128xf32>
      %30 = arith.addf %27, %29 : vector<32x128xf32>
      %c0_25 = arith.constant 0 : index
      %31 = memref.load %arg8[%c0_25] : memref<1xf32, #tpu.memory_space<smem>>
      %cst_26 = arith.constant 0.000000e+00 : f32
      %32 = vector.broadcast %cst_26 : f32 to vector<32x128xf32>
      %33 = arith.cmpf ogt, %30, %32 : vector<32x128xf32>
      %34 = vector.broadcast %31 : f32 to vector<32x128xf32>
      %35 = arith.mulf %34, %30 : vector<32x128xf32>
      %36 = arith.select %33, %30, %35 : vector<32x128xi1>, vector<32x128xf32>
      %c0_27 = arith.constant 0 : index
      %c0_28 = arith.constant 0 : index
      %37 = vector.load %arg9[%c0_27, %c0_28] : memref<32x128xf32, #tpu.memory_space<vmem>>, vector<32x128xf32>
      tpu.vector_store %arg9[%c0_27, %c0_28], %36 {strides = array<i32>} : memref<32x128xf32, #tpu.memory_space<vmem>>, vector<32x128xf32>,
    } else {
    }
    return
  }
  func.func @transform_0(%arg0: i32, %arg1: i32) -> (i32, i32) {
    %c0_i32 = arith.constant 0 : i32
    return %arg0, %arg1 : i32, i32
  }
  func.func @transform_1(%arg0: i32, %arg1: i32) -> (i32, i32) {
    %c0_i32 = arith.constant 0 : i32
    %c0_i32_0 = arith.constant 0 : i32
    return %arg1, %c0_i32 : i32, i32
  }
  func.func @transform_2(%arg0: i32, %arg1: i32) -> (i32, i32) {
    %c0_i32 = arith.constant 0 : i32
    %c0_i32_0 = arith.constant 0 : i32
    %c0_i32_1 = arith.constant 0 : i32
    return %c0_i32, %c0_i32_0 : i32, i32
  }
  func.func @transform_3(%arg0: i32, %arg1: i32) -> i32 {
    %c0_i32 = arith.constant 0 : i32
    %c0_i32_0 = arith.constant 0 : i32
    return %c0_i32 : i32
  }
  func.func @transform_4(%arg0: i32, %arg1: i32) -> (i32, i32) {
    %c0_i32 = arith.constant 0 : i32
    %c0_i32_0 = arith.constant 0 : i32
    %c0_i32_1 = arith.constant 0 : i32
    return %c0_i32, %c0_i32_0 : i32, i32
  }
  func.func @transform_5(%arg0: i32, %arg1: i32) -> (i32, i32) {
    %c0_i32 = arith.constant 0 : i32
    %c0_i32_0 = arith.constant 0 : i32
    %c0_i32_1 = arith.constant 0 : i32
    return %c0_i32, %c0_i32_0 : i32, i32
  }
  func.func @transform_6(%arg0: i32, %arg1: i32) -> i32 {
    %c0_i32 = arith.constant 0 : i32
    %c0_i32_0 = arith.constant 0 : i32
    return %c0_i32 : i32
  }
  func.func @transform_7(%arg0: i32, %arg1: i32) -> (i32, i32) {
    %c0_i32 = arith.constant 0 : i32
    %c0_i32_0 = arith.constant 0 : i32
    return %arg0, %c0_i32 : i32, i32
  }
}

</mosaic_0001>

<llo_original>
// kernel: tpu_custom_call.1
$region0: #{tpu_custom_call.1}
  #allocation0 [shape = 'u32[]', space=smem, size = 0x4, offset = 0x4, fixed_abs, tag = 'smem constant byte address 0x4 - core index']
  #allocation1 [shape = 'u32[144,128]{1,0:T(1,128)}', space=vmem, size = 0x12000, scoped, tag = 'internal scratch']
  #allocation2 [shape = 'f32[32,128]{1,0:T(8,128)}', space=vmem, size = 0x4000, scoped, tag = 'scratch operand']
  #allocation3 [shape = 'f32[1]{0:T(128)S(6)}', space=smem, size = 0x200, scoped, tag = 'scoped memory for tpu_custom_call.1']
  #allocation4 [shape = 'f32[1]{0:T(128)S(6)}', space=smem, size = 0x200, scoped, tag = 'scoped memory for tpu_custom_call.1']
  %s0 = inlined_call_operand.hbm [shape: f32[32,256], index: 0, kind: input, shape index: {}]
  %s1 = inlined_call_operand.hbm [shape: bf16[256,128], index: 1, kind: input, shape index: {}]
  %s2 = inlined_call_operand.vmem [shape: f32[1,128], index: 2, kind: input, shape index: {}]
  %s3 = inlined_call_operand.<no memory space> [shape: f32[1], index: 3, kind: input, shape index: {}]
  %s4 = inlined_call_operand.hbm [shape: bf16[128,128], index: 4, kind: input, shape index: {}]
  %s5 = inlined_call_operand.vmem [shape: f32[1,128], index: 5, kind: input, shape index: {}]
  %s6 = inlined_call_operand.<no memory space> [shape: f32[1], index: 6, kind: input, shape index: {}]
  %s7 = inlined_call_operand.hbm [shape: f32[32,128], index: 7, kind: output, shape index: {}]
  %s8 = sld [smem:[#allocation0]]
  $region58: #{tpu_custom_call.1} parent=0
    _
  %s10 = ssub.s32 1, %s8
  %s11 = scalar_select 0, %s10, %s8
  %12 = sst [smem:[#allocation3]] %s3
  %13 = sst [smem:[#allocation4]] %s6
  $region1: #{tpu_custom_call.1} parent=0
    #allocation5 [shape = 'u8[32768]{0}', space=vmem, size = 0x8000, scoped, tag = 'input window, operand 0, single buffered']
    #allocation6 [shape = 's32[1]{0}', space=sflag, size = 0x4, scoped, tag = 'scoped memory for tpu_custom_call.1']
    #allocation7 [shape = 's32[1]{0}', space=sflag, size = 0x4, scoped, tag = 'scoped memory for tpu_custom_call.1']
    #allocation8 [shape = 'u8[65536]{0}', space=vmem, size = 0x10000, scoped, tag = 'input window, operand 1, single buffered']
    #allocation9 [shape = 's32[1]{0}', space=sflag, size = 0x4, scoped, tag = 'scoped memory for tpu_custom_call.1']
    #allocation10 [shape = 'u8[32768]{0}', space=vmem, size = 0x8000, scoped, tag = 'input window, operand 4, single buffered']
    #allocation11 [shape = 'u8[16384]{0}', space=vmem, size = 0x4000, scoped, tag = 'output window, operand 0, single buffered']
    %14 = vsyncpa [#allocation6], 0
    %15 = vsyncpa [#allocation9], 0
    %16 = vsyncpa [#allocation7], 0
    // Predicated region
    $region2: #{tpu_custom_call.1} parent=1 // pred_check
      _
    $region3: #{tpu_custom_call.1} parent=1 // pred_check_branch
      %18 = sbr.rel (0) target = $region5
    $region4: #{tpu_custom_call.1} parent=1 // pred_region
      %s20 = ssub.s32 1024, 1024
      %21 = vsyncadd [#allocation6], %s20
      %s22 = sshll.u32 [#allocation5], 4
      %s23 = int_to_ptr.vmem [resolvable:$true] %s22
      %28 = dma.hbm_to_vmem [thread:$0]  %s0, 1024, %s23, [#allocation6], 256, 256, 16
    $region5: #{tpu_custom_call.1} parent=1 // pred_fallthru
      _
    // Predicated region
    $region6: #{tpu_custom_call.1} parent=1 // pred_check
      _
    $region7: #{tpu_custom_call.1} parent=1 // pred_check_branch
      %30 = sbr.rel (0) target = $region9
    $region8: #{tpu_custom_call.1} parent=1 // pred_region
      %s32 = ssub.s32 2048, 2048
      %33 = vsyncadd [#allocation9], %s32
      %s34 = sshll.u32 [#allocation8], 4
      %s35 = int_to_ptr.vmem [resolvable:$true] %s34
      %40 = dma.hbm_to_vmem [thread:$0]  %s1, 2048, %s35, [#allocation9], 64, 64, 4
    $region9: #{tpu_custom_call.1} parent=1 // pred_fallthru
      _
    // Predicated region
    $region10: #{tpu_custom_call.1} parent=1 // pred_check
      _
    $region11: #{tpu_custom_call.1} parent=1 // pred_check_branch
      %42 = sbr.rel (0) target = $region13
    $region12: #{tpu_custom_call.1} parent=1 // pred_region
      _
    $region13: #{tpu_custom_call.1} parent=1 // pred_fallthru
      _
    // Predicated region
    $region14: #{tpu_custom_call.1} parent=1 // pred_check
      _
    $region15: #{tpu_custom_call.1} parent=1 // pred_check_branch
      %44 = sbr.rel (0) target = $region17
    $region16: #{tpu_custom_call.1} parent=1 // pred_region
      _
    $region17: #{tpu_custom_call.1} parent=1 // pred_fallthru
      _
    // Predicated region
    $region18: #{tpu_custom_call.1} parent=1 // pred_check
      _
    $region19: #{tpu_custom_call.1} parent=1 // pred_check_branch
      %46 = sbr.rel (0) target = $region21
    $region20: #{tpu_custom_call.1} parent=1 // pred_region
      %s48 = ssub.s32 1024, 1024
      %49 = vsyncadd [#allocation9], %s48
      %s50 = sshll.u32 [#allocation10], 4
      %s51 = int_to_ptr.vmem [resolvable:$true] %s50
      %56 = dma.hbm_to_vmem [thread:$0]  %s4, 1024, %s51, [#allocation9], 64, 64, 4
    $region21: #{tpu_custom_call.1} parent=1 // pred_fallthru
      _
    // Predicated region
    $region22: #{tpu_custom_call.1} parent=1 // pred_check
      _
    $region23: #{tpu_custom_call.1} parent=1 // pred_check_branch
      %58 = sbr.rel (0) target = $region25
    $region24: #{tpu_custom_call.1} parent=1 // pred_region
      _
    $region25: #{tpu_custom_call.1} parent=1 // pred_fallthru
      _
    // Predicated region
    $region26: #{tpu_custom_call.1} parent=1 // pred_check
      _
    $region27: #{tpu_custom_call.1} parent=1 // pred_check_branch
      %60 = sbr.rel (0) target = $region29
    $region28: #{tpu_custom_call.1} parent=1 // pred_region
      _
    $region29: #{tpu_custom_call.1} parent=1 // pred_fallthru
      _
    // Predicated region
    $region30: #{tpu_custom_call.1} parent=1 // pred_check
      _
    $region31: #{tpu_custom_call.1} parent=1 // pred_check_branch
      %62 = sbr.rel (0) target = $region33
    $region32: #{tpu_custom_call.1} parent=1 // pred_region
      %63 = dma.done [#allocation6], 1024
    $region33: #{tpu_custom_call.1} parent=1 // pred_fallthru
      _
    // Predicated region
    $region34: #{tpu_custom_call.1} parent=1 // pred_check
      _
    $region35: #{tpu_custom_call.1} parent=1 // pred_check_branch
      %65 = sbr.rel (0) target = $region37
    $region36: #{tpu_custom_call.1} parent=1 // pred_region
      %66 = dma.done [#allocation9], 2048
    $region37: #{tpu_custom_call.1} parent=1 // pred_fallthru
      _
    // Predicated region
    $region38: #{tpu_custom_call.1} parent=1 // pred_check
      _
    $region39: #{tpu_custom_call.1} parent=1 // pred_check_branch
      %68 = sbr.rel (0) target = $region41
    $region40: #{tpu_custom_call.1} parent=1 // pred_region
      %69 = dma.done [#allocation9], 1024
    $region41: #{tpu_custom_call.1} parent=1 // pred_fallthru
      _
    %p71 = scmp.eq.s32.totalorder 0, 0
    // Predicated region
    $region42: #{tpu_custom_call.1} parent=1 // pred_check
      %p72 = pneg %p71
    $region43: #{tpu_custom_call.1} parent=1 // pred_check_branch
      %74 = sbr.rel (%p72) target = $region45
    $region44: #{tpu_custom_call.1} parent=1 // pred_region
      %75 = vst [vmem:[#allocation2] sm:$0xff] 0.0
      %76 = vst [vmem:[#allocation2 + $0x8] sm:$0xff] 0.0
      %77 = vst [vmem:[#allocation2 + $0x10] sm:$0xff] 0.0
      %78 = vst [vmem:[#allocation2 + $0x18] sm:$0xff] 0.0
    $region45: #{tpu_custom_call.1} parent=1 // pred_fallthru
      _
    %v79 = vld [vmem:[#allocation2] sm:$0xff]
    %v80 = vld [vmem:[#allocation2 + $0x8] sm:$0xff]
    %v81 = vld [vmem:[#allocation2 + $0x10] sm:$0xff]
    %v82 = vld [vmem:[#allocation2 + $0x18] sm:$0xff]
    %v83 = vld [vmem:[#allocation5] sm:$0xff]
    %v84 = vld [vmem:[#allocation5 + $0x8] sm:$0xff]
    %v85 = vld [vmem:[#allocation5 + $0x10] sm:$0xff]
    %v86 = vld [vmem:[#allocation5 + $0x18] sm:$0xff]
    %v87 = vld [vmem:[#allocation5 + $0x20] sm:$0xff]
    %v88 = vld [vmem:[#allocation5 + $0x28] sm:$0xff]
    %v89 = vld [vmem:[#allocation5 + $0x30] sm:$0xff]
    %v90 = vld [vmem:[#allocation5 + $0x38] sm:$0xff]
    %v91 = vpack.c.bf16 %v85, %v83
    %v92 = vpack.c.bf16 %v86, %v84
    %v93 = vpack.c.bf16 %v89, %v87
    %v94 = vpack.c.bf16 %v90, %v88
    %v95 = vld [vmem:[#allocation8] sm:$0xf]
    %v96 = vld [vmem:[#allocation8 + $0x4] sm:$0xf]
    %v97 = vld [vmem:[#allocation8 + $0x8] sm:$0xf]
    %v98 = vld [vmem:[#allocation8 + $0xc] sm:$0xf]
    %v99 = vld [vmem:[#allocation8 + $0x10] sm:$0xf]
    %v100 = vld [vmem:[#allocation8 + $0x14] sm:$0xf]
    %v101 = vld [vmem:[#allocation8 + $0x18] sm:$0xf]
    %v102 = vld [vmem:[#allocation8 + $0x1c] sm:$0xf]
    %v103 = vld [vmem:[#allocation8 + $0x20] sm:$0xf]
    %v104 = vld [vmem:[#allocation8 + $0x24] sm:$0xf]
    %v105 = vld [vmem:[#allocation8 + $0x28] sm:$0xf]
    %v106 = vld [vmem:[#allocation8 + $0x2c] sm:$0xf]
    %v107 = vld [vmem:[#allocation8 + $0x30] sm:$0xf]
    %v108 = vld [vmem:[#allocation8 + $0x34] sm:$0xf]
    %v109 = vld [vmem:[#allocation8 + $0x38] sm:$0xf]
    %v110 = vld [vmem:[#allocation8 + $0x3c] sm:$0xf]
    %v111 = vld [vmem:[#allocation8 + $0x40] sm:$0xf]
    %v112 = vld [vmem:[#allocation8 + $0x44] sm:$0xf]
    %v113 = vld [vmem:[#allocation8 + $0x48] sm:$0xf]
    %v114 = vld [vmem:[#allocation8 + $0x4c] sm:$0xf]
    %v115 = vld [vmem:[#allocation8 + $0x50] sm:$0xf]
    %v116 = vld [vmem:[#allocation8 + $0x54] sm:$0xf]
    %v117 = vld [vmem:[#allocation8 + $0x58] sm:$0xf]
    %v118 = vld [vmem:[#allocation8 + $0x5c] sm:$0xf]
    %v119 = vld [vmem:[#allocation8 + $0x60] sm:$0xf]
    %v120 = vld [vmem:[#allocation8 + $0x64] sm:$0xf]
    %v121 = vld [vmem:[#allocation8 + $0x68] sm:$0xf]
    %v122 = vld [vmem:[#allocation8 + $0x6c] sm:$0xf]
    %v123 = vld [vmem:[#allocation8 + $0x70] sm:$0xf]
    %v124 = vld [vmem:[#allocation8 + $0x74] sm:$0xf]
    %v125 = vld [vmem:[#allocation8 + $0x78] sm:$0xf]
    %v126 = vld [vmem:[#allocation8 + $0x7c] sm:$0xf]
    %v159 = vunpack.c.l.b16 %v95
    %v160 = vunpack.c.l.b16 %v96
    %v161 = vunpack.c.l.b16 %v97
    %v162 = vunpack.c.l.b16 %v98
    %v163 = vunpack.c.l.b16 %v99
    %v164 = vunpack.c.l.b16 %v100
    %v165 = vunpack.c.l.b16 %v101
    %v166 = vunpack.c.l.b16 %v102
    %v167 = vunpack.c.l.b16 %v103
    %v168 = vunpack.c.l.b16 %v104
    %v169 = vunpack.c.l.b16 %v105
    %v170 = vunpack.c.l.b16 %v106
    %v171 = vunpack.c.l.b16 %v107
    %v172 = vunpack.c.l.b16 %v108
    %v173 = vunpack.c.l.b16 %v109
    %v174 = vunpack.c.l.b16 %v110
    %v175 = vunpack.c.l.b16 %v111
    %v176 = vunpack.c.l.b16 %v112
    %v177 = vunpack.c.l.b16 %v113
    %v178 = vunpack.c.l.b16 %v114
    %v179 = vunpack.c.l.b16 %v115
    %v180 = vunpack.c.l.b16 %v116
    %v181 = vunpack.c.l.b16 %v117
    %v182 = vunpack.c.l.b16 %v118
    %v183 = vunpack.c.l.b16 %v119
    %v184 = vunpack.c.l.b16 %v120
    %v185 = vunpack.c.l.b16 %v121
    %v186 = vunpack.c.l.b16 %v122
    %v187 = vunpack.c.l.b16 %v123
    %v188 = vunpack.c.l.b16 %v124
    %v189 = vunpack.c.l.b16 %v125
    %v190 = vunpack.c.l.b16 %v126
    %v191 = vpack.c.b16 %v160, %v159
    %v192 = vpack.c.b16 %v162, %v161
    %v193 = vpack.c.b16 %v164, %v163
    %v194 = vpack.c.b16 %v166, %v165
    %v195 = vpack.c.b16 %v168, %v167
    %v196 = vpack.c.b16 %v170, %v169
    %v197 = vpack.c.b16 %v172, %v171
    %v198 = vpack.c.b16 %v174, %v173
    %v199 = vpack.c.b16 %v176, %v175
    %v200 = vpack.c.b16 %v178, %v177
    %v201 = vpack.c.b16 %v180, %v179
    %v202 = vpack.c.b16 %v182, %v181
    %v203 = vpack.c.b16 %v184, %v183
    %v204 = vpack.c.b16 %v186, %v185
    %v205 = vpack.c.b16 %v188, %v187
    %v206 = vpack.c.b16 %v190, %v189
    %223 = vmatprep.subr.bf16.mxu0 0
    %224 = vmatpush1.bf16.msra.mxu0 %v191
    %225 = vmatprep.subr.bf16.mxu0 0
    %226 = vmatpush1.bf16.msra.mxu0 %v192
    %227 = vmatprep.subr.bf16.mxu0 0
    %228 = vmatpush1.bf16.msra.mxu0 %v193
    %229 = vmatprep.subr.bf16.mxu0 0
    %230 = vmatpush1.bf16.msra.mxu0 %v194
    %231 = vmatprep.subr.bf16.mxu0 0
    %232 = vmatpush1.bf16.msra.mxu0 %v195
    %233 = vmatprep.subr.bf16.mxu0 0
    %234 = vmatpush1.bf16.msra.mxu0 %v196
    %235 = vmatprep.subr.bf16.mxu0 0
    %236 = vmatpush1.bf16.msra.mxu0 %v197
    %237 = vmatprep.subr.bf16.mxu0 0
    %238 = vmatpush1.bf16.msra.mxu0 %v198
    %239 = vmatprep.subr.bf16.mxu0 0
    %240 = vmatpush1.bf16.msra.mxu0 %v199
    %241 = vmatprep.subr.bf16.mxu0 0
    %242 = vmatpush1.bf16.msra.mxu0 %v200
    %243 = vmatprep.subr.bf16.mxu0 0
    %244 = vmatpush1.bf16.msra.mxu0 %v201
    %245 = vmatprep.subr.bf16.mxu0 0
    %246 = vmatpush1.bf16.msra.mxu0 %v202
    %247 = vmatprep.subr.bf16.mxu0 0
    %248 = vmatpush1.bf16.msra.mxu0 %v203
    %249 = vmatprep.subr.bf16.mxu0 0
    %250 = vmatpush1.bf16.msra.mxu0 %v204
    %251 = vmatprep.subr.bf16.mxu0 0
    %252 = vmatpush1.bf16.msra.mxu0 %v205
    %253 = vmatprep.subr.bf16.mxu0 0
    %254 = vmatpush1.bf16.msra.mxu0 %v206
    %255 = vmatprep.mubr.bf16.mxu0 %v92
    %256 = vmatmul.mubr.bf16.gmra.mrb[0].mxu0 %v91
    %v257 = vpop.f32.mrb[0].mxu0
    %v258 = vadd.f32 0.0, %v257
    %v259 = vpop.f32.mrb[0].mxu0
    %v260 = vpop.f32.mrb[0].mxu0
    %v261 = vadd.f32 0.0, %v260
    %v262 = vpop.f32.mrb[0].mxu0
    %263 = vmatprep.mubr.bf16.mxu0 %v94
    %264 = vmatmul.mubr.bf16.gmra.mrb[0].mxu0 %v93
    %v265 = vpop.f32.mrb[0].mxu0
    %v266 = vadd.f32 0.0, %v265
    %v267 = vpop.f32.mrb[0].mxu0
    %v268 = vpop.f32.mrb[0].mxu0
    %v269 = vadd.f32 0.0, %v268
    %v270 = vpop.f32.mrb[0].mxu0
    %271 = vdwg.mxu0
    %v272 = vadd.f32 %v79, %v258
    %v273 = vadd.f32 %v80, %v261
    %v274 = vadd.f32 %v81, %v266
    %v275 = vadd.f32 %v82, %v269
    %276 = vst [vmem:[#allocation2] sm:$0xff] %v272
    %277 = vst [vmem:[#allocation2 + $0x8] sm:$0xff] %v273
    %278 = vst [vmem:[#allocation2 + $0x10] sm:$0xff] %v274
    %279 = vst [vmem:[#allocation2 + $0x18] sm:$0xff] %v275
    // Predicated region
    $region46: #{tpu_custom_call.1} parent=1 // pred_check
      %p280 = pneg %p71
    $region47: #{tpu_custom_call.1} parent=1 // pred_check_branch
      %282 = sbr.rel (%p280) target = $region49
    $region48: #{tpu_custom_call.1} parent=1 // pred_region
      %v283 = vld [vmem:[#allocation2] sm:$0xff]
      %v284 = vld [vmem:[#allocation2 + $0x8] sm:$0xff]
      %v285 = vld [vmem:[#allocation2 + $0x10] sm:$0xff]
      %v286 = vld [vmem:[#allocation2 + $0x18] sm:$0xff]
      %v287 = vld [vmem:[%s2] sm:$0x1]
      %v289 = vlaneseq
      %v290 = vshrl.u32 %v289, 7
      %v291 = vsub.s32 0, %v290
      %v292 = vrot.slane %v287, %v291
      %v294 = vadd.f32 %v283, %v292
      %v295 = vadd.f32 %v284, %v292
      %v296 = vadd.f32 %v285, %v292
      %v297 = vadd.f32 %v286, %v292
      %s298 = sld [smem:[#allocation3]]
      %vm299 = vcmp.gt.f32.partialorder %v294, 0.0
      %vm300 = vcmp.gt.f32.partialorder %v295, 0.0
      %vm301 = vcmp.gt.f32.partialorder %v296, 0.0
      %vm302 = vcmp.gt.f32.partialorder %v297, 0.0
      %v303 = vstv %s298
      %v304 = vmul.f32 %v303, %v294
      %v305 = vmul.f32 %v303, %v295
      %v306 = vmul.f32 %v303, %v296
      %v307 = vmul.f32 %v303, %v297
      %v308 = vsel %vm299, %v294, %v304
      %v309 = vsel %vm300, %v295, %v305
      %v310 = vsel %vm301, %v296, %v306
      %v311 = vsel %vm302, %v297, %v307
      %312 = vst [vmem:[#allocation2] sm:$0xff] %v308
      %313 = vst [vmem:[#allocation2 + $0x8] sm:$0xff] %v309
      %314 = vst [vmem:[#allocation2 + $0x10] sm:$0xff] %v310
      %315 = vst [vmem:[#allocation2 + $0x18] sm:$0xff] %v311
      %v316 = vld [vmem:[#allocation2] sm:$0xff]
      %v317 = vld [vmem:[#allocation2 + $0x8] sm:$0xff]
      %v318 = vld [vmem:[#allocation2 + $0x10] sm:$0xff]
      %v319 = vld [vmem:[#allocation2 + $0x18] sm:$0xff]
      %v320 = vpack.c.bf16 %v317, %v316
      %v321 = vpack.c.bf16 %v319, %v318
      %v322 = vld [vmem:[#allocation10] sm:$0xf]
      %v323 = vld [vmem:[#allocation10 + $0x4] sm:$0xf]
      %v324 = vld [vmem:[#allocation10 + $0x8] sm:$0xf]
      %v325 = vld [vmem:[#allocation10 + $0xc] sm:$0xf]
      %v326 = vld [vmem:[#allocation10 + $0x10] sm:$0xf]
      %v327 = vld [vmem:[#allocation10 + $0x14] sm:$0xf]
      %v328 = vld [vmem:[#allocation10 + $0x18] sm:$0xf]
      %v329 = vld [vmem:[#allocation10 + $0x1c] sm:$0xf]
      %v330 = vld [vmem:[#allocation10 + $0x20] sm:$0xf]
      %v331 = vld [vmem:[#allocation10 + $0x24] sm:$0xf]
      %v332 = vld [vmem:[#allocation10 + $0x28] sm:$0xf]
      %v333 = vld [vmem:[#allocation10 + $0x2c] sm:$0xf]
      %v334 = vld [vmem:[#allocation10 + $0x30] sm:$0xf]
      %v335 = vld [vmem:[#allocation10 + $0x34] sm:$0xf]
      %v336 = vld [vmem:[#allocation10 + $0x38] sm:$0xf]
      %v337 = vld [vmem:[#allocation10 + $0x3c] sm:$0xf]
      %v338 = vld [vmem:[%s5] sm:$0x1]
      %v340 = vlaneseq
      %v341 = vshrl.u32 %v340, 7
      %v342 = vsub.s32 0, %v341
      %v343 = vrot.slane %v338, %v342
      %v361 = vunpack.c.l.b16 %v322
      %v362 = vunpack.c.l.b16 %v323
      %v363 = vunpack.c.l.b16 %v324
      %v364 = vunpack.c.l.b16 %v325
      %v365 = vunpack.c.l.b16 %v326
      %v366 = vunpack.c.l.b16 %v327
      %v367 = vunpack.c.l.b16 %v328
      %v368 = vunpack.c.l.b16 %v329
      %v369 = vunpack.c.l.b16 %v330
      %v370 = vunpack.c.l.b16 %v331
      %v371 = vunpack.c.l.b16 %v332
      %v372 = vunpack.c.l.b16 %v333
      %v373 = vunpack.c.l.b16 %v334
      %v374 = vunpack.c.l.b16 %v335
      %v375 = vunpack.c.l.b16 %v336
      %v376 = vunpack.c.l.b16 %v337
      %v377 = vpack.c.b16 %v362, %v361
      %v378 = vpack.c.b16 %v364, %v363
      %v379 = vpack.c.b16 %v366, %v365
      %v380 = vpack.c.b16 %v368, %v367
      %v381 = vpack.c.b16 %v370, %v369
      %v382 = vpack.c.b16 %v372, %v371
      %v383 = vpack.c.b16 %v374, %v373
      %v384 = vpack.c.b16 %v376, %v375
      %393 = vmatprep.subr.bf16.mxu0 0
      %394 = vmatpush1.bf16.msra.mxu0 %v377
      %395 = vmatprep.subr.bf16.mxu0 0
      %396 = vmatpush1.bf16.msra.mxu0 %v378
      %397 = vmatprep.subr.bf16.mxu0 0
      %398 = vmatpush1.bf16.msra.mxu0 %v379
      %399 = vmatprep.subr.bf16.mxu0 0
      %400 = vmatpush1.bf16.msra.mxu0 %v380
      %401 = vmatprep.subr.bf16.mxu0 0
      %402 = vmatpush1.bf16.msra.mxu0 %v381
      %403 = vmatprep.subr.bf16.mxu0 0
      %404 = vmatpush1.bf16.msra.mxu0 %v382
      %405 = vmatprep.subr.bf16.mxu0 0
      %406 = vmatpush1.bf16.msra.mxu0 %v383
      %407 = vmatprep.subr.bf16.mxu0 0
      %408 = vmatpush1.bf16.msra.mxu0 %v384
      %409 = vmatprep.subr.bf16.mxu0 0
      %410 = vmatpush1.bf16.msra.mxu0 0
      %411 = vmatprep.subr.bf16.mxu0 0
      %412 = vmatpush1.bf16.msra.mxu0 0
      %413 = vmatprep.subr.bf16.mxu0 0
      %414 = vmatpush1.bf16.msra.mxu0 0
      %415 = vmatprep.subr.bf16.mxu0 0
      %416 = vmatpush1.bf16.msra.mxu0 0
      %417 = vmatprep.subr.bf16.mxu0 0
      %418 = vmatpush1.bf16.msra.mxu0 0
      %419 = vmatprep.subr.bf16.mxu0 0
      %420 = vmatpush1.bf16.msra.mxu0 0
      %421 = vmatprep.subr.bf16.mxu0 0
      %422 = vmatpush1.bf16.msra.mxu0 0
      %423 = vmatprep.subr.bf16.mxu0 0
      %424 = vmatpush1.bf16.msra.mxu0 0
      %425 = vmatprep.mubr.bf16.mxu0 0
      %426 = vmatmul.mubr.bf16.gmra.mrb[0].mxu0 %v320
      %v427 = vpop.f32.mrb[0].mxu0
      %v428 = vadd.f32 %v343, %v427
      %v429 = vpop.f32.mrb[0].mxu0
      %v430 = vpop.f32.mrb[0].mxu0
      %v431 = vadd.f32 %v343, %v430
      %v432 = vpop.f32.mrb[0].mxu0
      %433 = vmatprep.mubr.bf16.mxu0 0
      %434 = vmatmul.mubr.bf16.gmra.mrb[0].mxu0 %v321
      %v435 = vpop.f32.mrb[0].mxu0
      %v436 = vadd.f32 %v343, %v435
      %v437 = vpop.f32.mrb[0].mxu0
      %v438 = vpop.f32.mrb[0].mxu0
      %v439 = vadd.f32 %v343, %v438
      %v440 = vpop.f32.mrb[0].mxu0
      %441 = vdwg.mxu0
      %s442 = sld [smem:[#allocation4]]
      %vm443 = vcmp.gt.f32.partialorder %v428, 0.0
      %vm444 = vcmp.gt.f32.partialorder %v431, 0.0
      %vm445 = vcmp.gt.f32.partialorder %v436, 0.0
      %vm446 = vcmp.gt.f32.partialorder %v439, 0.0
      %v447 = vstv %s442
      %v448 = vmul.f32 %v447, %v428
      %v449 = vmul.f32 %v447, %v431
      %v450 = vmul.f32 %v447, %v436
      %v451 = vmul.f32 %v447, %v439
      %v452 = vsel %vm443, %v428, %v448
      %v453 = vsel %vm444, %v431, %v449
      %v454 = vsel %vm445, %v436, %v450
      %v455 = vsel %vm446, %v439, %v451
      %456 = vst [vmem:[#allocation11] sm:$0xff] %v452
      %457 = vst [vmem:[#allocation11 + $0x8] sm:$0xff] %v453
      %458 = vst [vmem:[#allocation11 + $0x10] sm:$0xff] %v454
      %459 = vst [vmem:[#allocation11 + $0x18] sm:$0xff] %v455
    $region49: #{tpu_custom_call.1} parent=1 // pred_fallthru
      _
    // Predicated region
    $region50: #{tpu_custom_call.1} parent=1 // pred_check
      _
    $region51: #{tpu_custom_call.1} parent=1 // pred_check_branch
      %461 = sbr.rel (0) target = $region53
    $region52: #{tpu_custom_call.1} parent=1 // pred_region
      %s463 = ssub.s32 512, 512
      %464 = vsyncadd [#allocation7], %s463
      %s465 = sshll.u32 [#allocation11], 4
      %s466 = int_to_ptr.vmem [resolvable:$true] %s465
      %471 = dma.vmem_to_hbm [thread:$0]  %s466, 512, %s7, [#allocation7], 128, 128, 8
    $region53: #{tpu_custom_call.1} parent=1 // pred_fallthru
      _
    // Predicated region
    $region54: #{tpu_custom_call.1} parent=1 // pred_check
      _
    $region55: #{tpu_custom_call.1} parent=1 // pred_check_branch
      %473 = sbr.rel (0) target = $region57
    $region56: #{tpu_custom_call.1} parent=1 // pred_region
      %474 = dma.done [#allocation7], 512
    $region57: #{tpu_custom_call.1} parent=1 // pred_fallthru
      _
    %475 = vsyncpa [#allocation6], 1
    %476 = vsyncpa [#allocation9], 1
    %477 = vsyncpa [#allocation7], 1

</llo_original>
